<compile_context>
chip_gen: v7x
topology: tpu7x:2x2x1
jax: 0.10.0
libtpu: 0.0.40
codegen_flags: <defaults>
</compile_context>

<pallas_src>
import functools
import math

import jax
import jax.numpy as jnp
from jax import lax
from jax.experimental import pallas as pl
from jax.experimental.pallas import tpu as pltpu


# ----------------------------------------------------------------------------
# One-time on-device probe of pltpu.roll's rotation direction.  The result is
# a static Python bool baked into the kernel, so the interleaved pair-swap is
# correct regardless of the roll sign convention.
# ----------------------------------------------------------------------------
@functools.lru_cache(maxsize=None)
def _roll_matches_numpy() -> bool:
    def _probe(x_ref, o_ref):
        o_ref[...] = pltpu.roll(x_ref[...], 1, 1)

    x = jnp.arange(8 * 128, dtype=jnp.float32).reshape(8, 128)
    y = pl.pallas_call(
        _probe, out_shape=jax.ShapeDtypeStruct((8, 128), jnp.float32))(x)
    # np.roll(row, 1)[0] == row[-1]
    return bool(y[0, 0] == x[0, 127])


# ----------------------------------------------------------------------------
# Kernel
# ----------------------------------------------------------------------------
def _gqa_kernel(x_q_ref, x_kv_ref, wq_ref, wk_ref, wv_ref, wo_ref, bo_ref,
                cos_q_ref, sin_q_ref, cos_k_ref, sin_k_ref,
                o_ref,
                q_scr, m_scr, l_scr, acc_scr,
                *, num_heads, num_groups, masked, roll_like_numpy):
    TQ = x_q_ref.shape[1]
    TK = x_kv_ref.shape[1]
    E = x_q_ref.shape[2]
    GD = wk_ref.shape[1]
    G = num_groups
    gs = num_heads // num_groups
    hd = GD // num_groups

    qi = pl.program_id(1)
    ki = pl.program_id(2)
    nk = pl.num_programs(2)

    cd = x_q_ref.dtype                       # MXU compute dtype (f32 or bf16)
    scale = 1.0 / math.sqrt(hd)
    neg_big = jnp.float32(-1e30)

    def pair_swap(t):
        # Interleaved pair swap on the lane axis via XLU rolls + VPU select
        # (no rotation matmuls):  out[:, 2i] = t[:, 2i+1], out[:, 2i+1] = t[:, 2i]
        w = t.shape[-1]
        s_next = (w - 1) if roll_like_numpy else 1   # lane i <- lane i+1
        s_prev = 1 if roll_like_numpy else (w - 1)   # lane i <- lane i-1
        nxt = pltpu.roll(t, s_next, 1)
        prv = pltpu.roll(t, s_prev, 1)
        lane = lax.broadcasted_iota(jnp.int32, t.shape, 1)
        return jnp.where(lane % 2 == 0, nxt, prv)

    def rope(t, cos_t, sin_signed_t):
        # Full-width RoPE (all heads / groups at once).  The (-1)^lane sign of
        # the rotated term is pre-folded into sin_signed_t on the host.
        return t * cos_t + pair_swap(t) * sin_signed_t

    # ---- first kv tile: init online-softmax state, project + RoPE the Q tile
    @pl.when(ki == 0)
    def _():
        q = jnp.dot(x_q_ref[0], wq_ref[...],
                    preferred_element_type=jnp.float32)            # (TQ, E)
        q_scr[...] = rope(q, cos_q_ref[...], sin_q_ref[...])
        m_scr[...] = jnp.full(m_scr.shape, neg_big, jnp.float32)
        l_scr[...] = jnp.zeros(l_scr.shape, jnp.float32)
        acc_scr[...] = jnp.zeros(acc_scr.shape, jnp.float32)

    def kv_step():
        xkv = x_kv_ref[0]                                           # (TK, E)
        k = jnp.dot(xkv, wk_ref[...], preferred_element_type=jnp.float32)
        v = jnp.dot(xkv, wv_ref[...], preferred_element_type=jnp.float32)
        k = rope(k, cos_k_ref[...], sin_k_ref[...])                 # (TK, GD)

        if masked:
            # Causal bias built once per kv step (hoisted out of group loop);
            # rows index (q_local, head_in_group) pairs.
            r = lax.broadcasted_iota(jnp.int32, (TQ * gs, TK), 0)
            c = lax.broadcasted_iota(jnp.int32, (TQ * gs, TK), 1)
            q_pos = qi * TQ + r // gs
            k_pos = ki * TK + c
            bias = jnp.where(q_pos >= k_pos, 0.0, neg_big).astype(jnp.float32)

        q_all = q_scr[...]                                          # (TQ, E) f32
        dims = (((1,), (1,)), ((), ()))     # contract last dims; no K transpose

        for g in range(G):                  # G = number of KV heads (small)
            # Fold the heads of group g into the sublane axis -> one large MXU
            # matmul per group instead of num_heads tiny (hd-wide) ones.
            qg = q_all[:, g * gs * hd:(g + 1) * gs * hd]
            qg = qg.reshape(TQ * gs, hd).astype(cd)
            kg = k[:, g * hd:(g + 1) * hd].astype(cd)               # (TK, hd)
            vg = v[:, g * hd:(g + 1) * hd].astype(cd)               # (TK, hd)

            s = lax.dot_general(qg, kg, dims,
                                preferred_element_type=jnp.float32) * scale
            if masked:
                s = s + bias

            m_prev = m_scr[g]
            m_new = jnp.maximum(m_prev, jnp.max(s, axis=-1, keepdims=True))
            alpha = jnp.exp(m_prev - m_new)
            p = jnp.exp(s - m_new)
            l_scr[g] = alpha * l_scr[g] + jnp.sum(p, axis=-1, keepdims=True)
            acc_scr[g] = alpha * acc_scr[g] + jnp.dot(
                p.astype(cd), vg, preferred_element_type=jnp.float32)
            m_scr[g] = m_new

    if masked:
        # Skip kv tiles that lie entirely above the causal diagonal.
        @pl.when(ki * TK <= qi * TQ + (TQ - 1))
        def _():
            kv_step()
    else:
        kv_step()

    # ---- last kv tile: normalize, concat-free output projection, store ----
    @pl.when(ki == nk - 1)
    def _():
        wo = wo_ref[...]
        out = jnp.zeros((TQ, E), jnp.float32)
        for g in range(G):
            inv_l = pl.reciprocal(l_scr[g], approx=True)            # EUP slot
            y = (acc_scr[g] * inv_l).reshape(TQ, gs * hd)
            out = out + jnp.dot(y.astype(cd),
                                wo[g * gs * hd:(g + 1) * gs * hd, :],
                                preferred_element_type=jnp.float32)
        o_ref[0] = (out + bo_ref[...]).astype(o_ref.dtype)          # lane-dense


# ----------------------------------------------------------------------------
# Wrapper
# ----------------------------------------------------------------------------
def gqa_forward(x, wq, wk, wv, wo, bo, cos, sin, *,
                num_heads, num_groups, masked=False,
                q_tile=None, kv_tile=None, compute_dtype=None):
    B, S, E = x.shape
    assert E % num_heads == 0 and num_heads % num_groups == 0
    hd = E // num_heads
    assert hd % 2 == 0
    G = num_groups
    gs = num_heads // G
    GD = G * hd
    out_dtype = x.dtype

    if compute_dtype is None:
        compute_dtype = x.dtype
    compute_dtype = jnp.dtype(compute_dtype)
    x = x.astype(compute_dtype)
    wq = wq.astype(compute_dtype)
    wk = wk.astype(compute_dtype)
    wv = wv.astype(compute_dtype)
    wo = wo.astype(compute_dtype)
    bo = bo.astype(jnp.float32).reshape(1, E)

    TQ = q_tile if q_tile is not None else min(S, 128)
    TK = kv_tile if kv_tile is not None else min(S, 128)
    assert S % TQ == 0 and S % TK == 0
    assert (TQ % 8 == 0) or (TQ == S)
    assert (TK % 8 == 0) or (TK == S)
    nq, nk = S // TQ, S // TK

    # Host-side RoPE tables, pre-tiled to the full projection widths (hoisted
    # broadcast) with the pair-swap sign folded into sin.
    cos = jnp.asarray(cos, jnp.float32)[:S]                # (S, hd)
    sin = jnp.asarray(sin, jnp.float32)[:S]
    sign = jnp.where(jnp.arange(hd) % 2 == 0, -1.0, 1.0).astype(jnp.float32)
    sin_signed = sin * sign[None, :]
    cos_q = jnp.tile(cos, (1, num_heads))                  # (S, E)
    sin_q = jnp.tile(sin_signed, (1, num_heads))           # (S, E)
    cos_k = jnp.tile(cos, (1, G))                          # (S, GD)
    sin_k = jnp.tile(sin_signed, (1, G))                   # (S, GD)

    kernel = functools.partial(
        _gqa_kernel,
        num_heads=num_heads, num_groups=num_groups, masked=masked,
        roll_like_numpy=_roll_matches_numpy())

    const = lambda b, qi, ki: (0, 0)   # noqa: E731  (weights stay resident)

    itemsize = compute_dtype.itemsize
    # Advisory cost estimate for the XLA scheduler.
    flops = int(2 * B * S * E * E                          # Q projection
                + 2 * B * nq * S * E * GD * 2              # K/V proj (per q tile)
                + 2 * B * num_heads * S * S * hd * 2       # QK^T + PV
                + 2 * B * S * E * E)                       # output projection
    transcendentals = int(B * num_heads * S * S)
    bytes_accessed = int((2 * E * E + 2 * E * GD) * itemsize
                         + 2 * B * S * E * itemsize
                         + (2 * S * E + 2 * S * GD + E) * 4
                         + B * S * E * jnp.dtype(out_dtype).itemsize)

    # Rough VMEM footprint -> explicit scoped-vmem limit (v7x has only 64 MiB).
    vmem_est = ((2 * E * E + 2 * E * GD) * itemsize        # resident weights
                + 2 * (TQ + TK) * E * itemsize             # x blocks (2x buffered)
                + 2 * (2 * TQ * E + 2 * TK * GD) * 4       # cos/sin blocks
                + 2 * TQ * E * jnp.dtype(out_dtype).itemsize
                + (TQ * E + G * TQ * gs * (hd + 2)) * 4)   # scratch
    vmem_limit = int(min(max(2 * vmem_est, 32 * 2 ** 20), 48 * 2 ** 20))

    grid_spec = pltpu.PrefetchScalarGridSpec(
        num_scalar_prefetch=0,
        grid=(B, nq, nk),
        in_specs=[
            pl.BlockSpec((1, TQ, E), lambda b, qi, ki: (b, qi, 0)),   # x (q rows)
            pl.BlockSpec((1, TK, E), lambda b, qi, ki: (b, ki, 0)),   # x (kv rows)
            pl.BlockSpec((E, E), const),    # Wq (constant index map -> resident)
            pl.BlockSpec((E, GD), const),   # Wk
            pl.BlockSpec((E, GD), const),   # Wv
            pl.BlockSpec((E, E), const),    # Wo
            pl.BlockSpec((1, E), const),    # bo
            pl.BlockSpec((TQ, E), lambda b, qi, ki: (qi, 0)),   # cos (q, tiled)
            pl.BlockSpec((TQ, E), lambda b, qi, ki: (qi, 0)),   # sin (q, signed)
            pl.BlockSpec((TK, GD), lambda b, qi, ki: (ki, 0)),  # cos (k, tiled)
            pl.BlockSpec((TK, GD), lambda b, qi, ki: (ki, 0)),  # sin (k, signed)
        ],
        out_specs=pl.BlockSpec((1, TQ, E), lambda b, qi, ki: (b, qi, 0)),
        scratch_shapes=[
            pltpu.VMEM((TQ, E), jnp.float32),               # RoPE'd Q tile
            pltpu.VMEM((G, TQ * gs, 1), jnp.float32),       # online-softmax m
            pltpu.VMEM((G, TQ * gs, 1), jnp.float32),       # online-softmax l
            pltpu.VMEM((G, TQ * gs, hd), jnp.float32),      # output accumulator
        ],
    )

    return pl.pallas_call(
        kernel,
        out_shape=jax.ShapeDtypeStruct((B, S, E), out_dtype),
        grid_spec=grid_spec,
        compiler_params=pltpu.CompilerParams(
            dimension_semantics=("parallel", "parallel", "arbitrary"),
            vmem_limit_bytes=vmem_limit),
        cost_estimate=pl.CostEstimate(
            flops=flops, transcendentals=transcendentals,
            bytes_accessed=bytes_accessed),
    )(x, x, wq, wk, wv, wo, bo, cos_q, sin_q, cos_k, sin_k)


# ----------------------------------------------------------------------------
# RoPE tables (matches GQA._precompute_cos_sin)
# ----------------------------------------------------------------------------
def precompute_cos_sin(head_dim, context_length):
    i_s = jnp.arange(1, head_dim // 2 + 1, dtype=jnp.float32)
    theta = 1000.0 ** (-2.0 * (i_s - 1.0) / head_dim)
    theta = jnp.repeat(theta, 2)                    # each value twice (interleaved)
    m = jnp.arange(context_length, dtype=jnp.float32)[:, None]
    angles = m * theta[None, :]
    return jnp.cos(angles), jnp.sin(angles)


# ----------------------------------------------------------------------------
# Pure-JAX reference (mirrors the PyTorch forward)
# ----------------------------------------------------------------------------
def gqa_reference(x, wq, wk, wv, wo, bo, cos, sin, *,
                  num_heads, num_groups, masked=False):
    x = x.astype(jnp.float32)
    B, S, E = x.shape
    hd = E // num_heads
    gs = num_heads // num_groups

    Q = (x @ wq).reshape(B, S, num_heads, hd).transpose(0, 2, 1, 3)
    K = (x @ wk).reshape(B, S, num_groups, hd).transpose(0, 2, 1, 3)
    V = (x @ wv).reshape(B, S, num_groups, hd).transpose(0, 2, 1, 3)

    def rot(t):
        x1 = t[..., ::2]
        x2 = t[..., 1::2]
        return jnp.stack([-x2, x1], axis=-1).reshape(t.shape)

    Q = Q * cos[:S] + rot(Q) * sin[:S]
    K = K * cos[:S] + rot(K) * sin[:S]
    K = jnp.repeat(K, gs, axis=1)
    V = jnp.repeat(V, gs, axis=1)

    s = jnp.einsum('bhqd,bhkd->bhqk', Q, K) / math.sqrt(hd)
    if masked:
        causal = jnp.tril(jnp.ones((S, S), dtype=bool))
        s = jnp.where(causal, s, -jnp.inf)
    p = jax.nn.softmax(s, axis=-1)
    o = jnp.einsum('bhqk,bhkd->bhqd', p, V).transpose(0, 2, 1, 3).reshape(B, S, E)
    return o @ wo + bo


# ----------------------------------------------------------------------------
# Main
# ----------------------------------------------------------------------------
def _run_case(name, *, B, S, E, H, G, ctx, masked, compute_dtype,
              q_tile, kv_tile, atol, rtol):
    hd = E // H
    GD = G * hd
    key = jax.random.PRNGKey(0)
    kx, kq, kk, kv, ko, kb = jax.random.split(key, 6)

    x = jax.random.normal(kx, (B, S, E), dtype=jnp.float32)
    lim = 1.0 / math.sqrt(E)
    wq = jax.random.uniform(kq, (E, E), minval=-lim, maxval=lim, dtype=jnp.float32)
    wk = jax.random.uniform(kk, (E, GD), minval=-lim, maxval=lim, dtype=jnp.float32)
    wv = jax.random.uniform(kv, (E, GD), minval=-lim, maxval=lim, dtype=jnp.float32)
    wo = jax.random.uniform(ko, (E, E), minval=-lim, maxval=lim, dtype=jnp.float32)
    bo = jax.random.uniform(kb, (1, E), minval=-lim, maxval=lim, dtype=jnp.float32)

    cos, sin = precompute_cos_sin(hd, ctx)

    out = gqa_forward(x, wq, wk, wv, wo, bo, cos, sin,
                      num_heads=H, num_groups=G, masked=masked,
                      q_tile=q_tile, kv_tile=kv_tile,
                      compute_dtype=compute_dtype)
    out = jax.block_until_ready(out)

    ref = gqa_reference(x, wq, wk, wv, wo, bo, cos, sin,
                        num_heads=H, num_groups=G, masked=masked)

    assert out.shape == (B, S, E)
    out32 = out.astype(jnp.float32)
    err = float(jnp.max(jnp.abs(out32 - ref)))
    assert jnp.allclose(out32, ref, atol=atol, rtol=rtol), \
        f"{name}: max abs err = {err}"


if __name__ == "__main__":
    # Small shapes, but with 128-multiple lane widths (E=256, G*hd=128) so the
    # kernel exercises the same layout path as realistic sizes.
    _run_case("small/unmasked/f32", B=2, S=8, E=256, H=4, G=2, ctx=16,
              masked=False, compute_dtype=jnp.float32,
              q_tile=8, kv_tile=8, atol=2e-2, rtol=2e-2)
    _run_case("small/causal/f32", B=2, S=8, E=256, H=4, G=2, ctx=16,
              masked=True, compute_dtype=jnp.float32,
              q_tile=8, kv_tile=8, atol=2e-2, rtol=2e-2)
    # Multi-tile flash path (2 q tiles x 2 kv tiles, causal skip exercised).
    _run_case("tiled/causal/f32", B=2, S=256, E=256, H=4, G=2, ctx=256,
              masked=True, compute_dtype=jnp.float32,
              q_tile=128, kv_tile=128, atol=2e-2, rtol=2e-2)
    # bf16 MXU path (f32 accumulation), loose tolerance vs. f32 reference.
    _run_case("tiled/causal/bf16", B=2, S=256, E=256, H=4, G=2, ctx=256,
              masked=True, compute_dtype=jnp.bfloat16,
              q_tile=128, kv_tile=128, atol=1e-1, rtol=1e-1)

    print("KERNEL_OK")
</pallas_src>

<mosaic_0001>
module attributes {stable_mosaic.version = 11 : i64} {
  func.func @_probe(%arg0: memref<8x128xf32, #tpu.memory_space<vmem>>, %arg1: memref<8x128xf32, #tpu.memory_space<vmem>>) attributes {dimension_semantics = [], scalar_prefetch = 0 : i64, scratch_operands = 0 : i64, tpu.core_type = #tpu.core_type<tc>} {
    %c0 = arith.constant 0 : index
    %c0_0 = arith.constant 0 : index
    %0 = vector.load %arg0[%c0, %c0_0] : memref<8x128xf32, #tpu.memory_space<vmem>>, vector<8x128xf32>
    %c1_i32 = arith.constant 1 : i32
    %1 = tpu.dynamic_rotate %0 by %c1_i32 dim 1 : vector<8x128xf32>, i32 -> vector<8x128xf32>
    %c0_1 = arith.constant 0 : index
    %c0_2 = arith.constant 0 : index
    %2 = vector.load %arg1[%c0_1, %c0_2] : memref<8x128xf32, #tpu.memory_space<vmem>>, vector<8x128xf32>
    tpu.vector_store %arg1[%c0_1, %c0_2], %1 {strides = array<i32>} : memref<8x128xf32, #tpu.memory_space<vmem>>, vector<8x128xf32>,
    return
  }
}

</mosaic_0001>

<llo_original>
// kernel: tpu_custom_call.1
$region0: #{tpu_custom_call.1}
  #allocation0 [shape = 'u32[]', space=smem, size = 0x4, offset = 0x4, fixed_abs, tag = 'smem constant byte address 0x4 - core index']
  #allocation1 [shape = 'u32[144,128]{1,0:T(1,128)}', space=vmem, size = 0x12000, scoped, tag = 'internal scratch']
  %s0 = inlined_call_operand.hbm [shape: f32[8,128], index: 0, kind: input, shape index: {}]
  %s1 = inlined_call_operand.hbm [shape: f32[8,128], index: 1, kind: output, shape index: {}]
  %s2 = sld [smem:[#allocation0]]
  $region18: #{tpu_custom_call.1} parent=0
    _
  %s4 = ssub.s32 1, %s2
  %s5 = scalar_select 0, %s4, %s2
  $region1: #{tpu_custom_call.1} parent=0
    #allocation2 [shape = 'u8[4096]{0}', space=vmem, size = 0x1000, scoped, tag = 'input window, operand 0, single buffered']
    #allocation3 [shape = 's32[1]{0}', space=sflag, size = 0x4, scoped, tag = 'scoped memory for tpu_custom_call.1']
    #allocation4 [shape = 's32[1]{0}', space=sflag, size = 0x4, scoped, tag = 'scoped memory for tpu_custom_call.1']
    #allocation5 [shape = 'u8[4096]{0}', space=vmem, size = 0x1000, scoped, tag = 'output window, operand 0, single buffered']
    %6 = vsyncpa [#allocation3], 0
    %7 = vsyncpa [#allocation4], 0
    // Predicated region
    $region2: #{tpu_custom_call.1} parent=1 // pred_check
      _
    $region3: #{tpu_custom_call.1} parent=1 // pred_check_branch
      %9 = sbr.rel (0) target = $region5
    $region4: #{tpu_custom_call.1} parent=1 // pred_region
      %s11 = ssub.s32 128, 128
      %12 = vsyncadd [#allocation3], %s11
      %s14 = sshll.u32 [#allocation2], 4
      %s15 = int_to_ptr.vmem [resolvable:$true] %s14
      %17 = dma.hbm_to_vmem [thread:$0]  %s0, 128, %s15, [#allocation3]
    $region5: #{tpu_custom_call.1} parent=1 // pred_fallthru
      _
    // Predicated region
    $region6: #{tpu_custom_call.1} parent=1 // pred_check
      _
    $region7: #{tpu_custom_call.1} parent=1 // pred_check_branch
      %19 = sbr.rel (0) target = $region9
    $region8: #{tpu_custom_call.1} parent=1 // pred_region
      %20 = dma.done [#allocation3], 128
    $region9: #{tpu_custom_call.1} parent=1 // pred_fallthru
      _
    %v21 = vld [vmem:[#allocation2] sm:$0xff]
    %22 = vrot.lane.b32.xlu0 %v21, 1
    %v23 = vpop.permute.xlu0 %22
    %24 = vst [vmem:[#allocation5] sm:$0xff] %v23
    // Predicated region
    $region10: #{tpu_custom_call.1} parent=1 // pred_check
      _
    $region11: #{tpu_custom_call.1} parent=1 // pred_check_branch
      %26 = sbr.rel (0) target = $region13
    $region12: #{tpu_custom_call.1} parent=1 // pred_region
      %s28 = ssub.s32 128, 128
      %29 = vsyncadd [#allocation4], %s28
      %s31 = sshll.u32 [#allocation5], 4
      %s32 = int_to_ptr.vmem [resolvable:$true] %s31
      %34 = dma.vmem_to_hbm [thread:$0]  %s32, 128, %s1, [#allocation4]
    $region13: #{tpu_custom_call.1} parent=1 // pred_fallthru
      _
    // Predicated region
    $region14: #{tpu_custom_call.1} parent=1 // pred_check
      _
    $region15: #{tpu_custom_call.1} parent=1 // pred_check_branch
      %36 = sbr.rel (0) target = $region17
    $region16: #{tpu_custom_call.1} parent=1 // pred_region
      %37 = dma.done [#allocation4], 128
    $region17: #{tpu_custom_call.1} parent=1 // pred_fallthru
      _
    %38 = vsyncpa [#allocation3], 1
    %39 = vsyncpa [#allocation4], 1

</llo_original>
